<compile_context>
chip_gen: v7x
topology: tpu7x:2x2x1
jax: 0.10.0
libtpu: 0.0.40
codegen_flags: <defaults>
</compile_context>

<pallas_src>
import functools

import jax
import jax.numpy as jnp
from jax.experimental import pallas as pl
from jax.experimental.pallas import tpu as pltpu


def _round_up(x: int, m: int) -> int:
    return (x + m - 1) // m * m


def _vmem_capacity_bytes() -> int:
    """Physical VMEM per core (v5e/v6e: 128 MiB, v7x: 64 MiB); conservative fallback."""
    try:
        cap = getattr(pltpu.get_tpu_info(), "vmem_capacity_bytes", None)
        if cap:
            return int(cap)
    except Exception:
        pass
    return 64 * 1024 * 1024


def linear_kernel(x_ref, w_ref, b_ref, o_ref):
    # x_ref: (tm, tk)   w_ref: (tk, tn)  (pre-transposed K-major -> no in-kernel vxpose)
    # b_ref: (1, tn)    o_ref: (tm, tn) f32, resident across the K grid axis (accumulator)
    k = pl.program_id(2)

    @pl.when(k == 0)
    def _init():
        # Seed the resident output tile with the broadcast bias -> no epilogue copy.
        o_ref[...] = jnp.zeros_like(o_ref) + b_ref[...]

    o_ref[...] += jax.lax.dot_general(
        x_ref[...],
        w_ref[...],
        dimension_numbers=(((1,), (0,)), ((), ())),
        preferred_element_type=jnp.float32,
    )


@functools.partial(jax.jit, static_argnames=("tm", "tn", "tk", "compute_dtype"))
def linear_forward(x, weight, bias, *, tm=None, tn=None, tk=None, compute_dtype=None):
    """Pallas equivalent of Model.forward: nn.Linear(in_features, out_features)."""
    batch, in_features = x.shape
    out_features = weight.shape[0]
    result_dtype = x.dtype

    cd = jnp.dtype(compute_dtype) if compute_dtype is not None else jnp.dtype(x.dtype)
    in_bytes = cd.itemsize
    m_align = 16 if in_bytes == 2 else (32 if in_bytes == 1 else 8)

    # ---- generation-aware tile defaults & VMEM budget -------------------------
    capacity = _vmem_capacity_bytes()
    budget = (capacity * 3) // 4            # ~48 MiB on v7x, ~96 MiB on v5e/v6e
    if capacity >= 96 * 1024 * 1024:        # v5e / v6e (128 MiB physical VMEM)
        tm_d, tn_d, tk_d = 1024, 512, 1024
    else:                                   # v7x (64 MiB per TensorCore)
        tm_d, tn_d, tk_d = 512, 512, 1024

    if tm is None:
        tm = min(tm_d, _round_up(batch, m_align))
    if tn is None:
        tn = min(tn_d, _round_up(out_features, 128))
    if tk is None:
        tk = min(tk_d, _round_up(in_features, 128))

    # Validate tiling constraints (covers user-supplied tiles too).
    if tm % m_align or tn % 128 or tk % 128:
        raise ValueError(
            f"tile sizes must satisfy tm % {m_align} == 0, tn % 128 == 0, "
            f"tk % 128 == 0; got tm={tm}, tn={tn}, tk={tk}")

    # Keep double-buffered x/W tiles + double-buffered f32 output tile under budget.
    def _footprint(tm_, tn_, tk_):
        return 2 * (tm_ * tk_ + tk_ * tn_) * in_bytes + 2 * tm_ * tn_ * 4

    while _footprint(tm, tn, tk) > budget and tk > 128:
        tk //= 2
    while _footprint(tm, tn, tk) > budget and tm > m_align:
        tm = max(m_align, tm // 2)

    m_pad = _round_up(batch, tm)
    k_pad = _round_up(in_features, tk)
    n_pad = _round_up(out_features, tn)

    # Pre-transpose W once in HBM to (K, N): the kernel contracts directly on the
    # shared K axis, so Mosaic never needs a per-K-step XLU transpose of the RHS.
    w_t = weight.T  # (in_features, out_features)

    # Zero-pad only when necessary (aligned shapes skip a full extra HBM copy).
    x_p = x
    if m_pad != batch or k_pad != in_features:
        x_p = jnp.pad(x, ((0, m_pad - batch), (0, k_pad - in_features)))
    w_p = w_t
    if k_pad != in_features or n_pad != out_features:
        w_p = jnp.pad(w_t, ((0, k_pad - in_features), (0, n_pad - out_features)))
    b_p = bias.astype(jnp.float32).reshape(1, out_features)
    if n_pad != out_features:
        b_p = jnp.pad(b_p, ((0, 0), (0, n_pad - out_features)))

    # Optional low-precision MXU path (bf16 native on v5e/v6e/v7x); accumulation
    # and the bias add stay in f32.
    if x_p.dtype != cd:
        x_p = x_p.astype(cd)
    if w_p.dtype != cd:
        w_p = w_p.astype(cd)

    grid_m, grid_n, grid_k = m_pad // tm, n_pad // tn, k_pad // tk

    # Megacore (v7x, 2 TCs): lead with a parallel axis that actually has >= 2
    # tiles -- for skinny-batch linears that is N, not M.
    if grid_m < grid_n:
        grid = (grid_n, grid_m, grid_k)
        x_map = lambda j, i, k: (i, k)
        w_map = lambda j, i, k: (k, j)
        b_map = lambda j, i, k: (0, j)
        o_map = lambda j, i, k: (i, j)
    else:
        grid = (grid_m, grid_n, grid_k)
        x_map = lambda i, j, k: (i, k)
        w_map = lambda i, j, k: (k, j)
        b_map = lambda i, j, k: (0, j)
        o_map = lambda i, j, k: (i, j)

    out_p = pl.pallas_call(
        linear_kernel,
        out_shape=jax.ShapeDtypeStruct((m_pad, n_pad), jnp.float32),
        grid=grid,
        in_specs=[
            pl.BlockSpec((tm, tk), x_map),   # x tile
            pl.BlockSpec((tk, tn), w_map),   # W tile, already (K, N)
            pl.BlockSpec((1, tn), b_map),    # bias tile
        ],
        out_specs=pl.BlockSpec((tm, tn), o_map),
        compiler_params=pltpu.CompilerParams(
            dimension_semantics=("parallel", "parallel", "arbitrary"),
            vmem_limit_bytes=int(budget),
        ),
    )(x_p, w_p, b_p)

    out = out_p[:batch, :out_features]
    if out.dtype != result_dtype:
        out = out.astype(result_dtype)
    return out


if __name__ == "__main__":
    # Same sizes the data-parallel tutorial uses: input_size=5, output_size=2, batch=30.
    input_size = 5
    output_size = 2
    batch_size = 30

    key = jax.random.PRNGKey(0)
    kx, kw, kb = jax.random.split(key, 3)

    # Deterministic init mimicking nn.Linear's default
    # (uniform in [-1/sqrt(in_features), 1/sqrt(in_features)]).
    bound = 1.0 / (input_size ** 0.5)
    weight = jax.random.uniform(
        kw, (output_size, input_size), jnp.float32, minval=-bound, maxval=bound
    )
    bias = jax.random.uniform(
        kb, (output_size,), jnp.float32, minval=-bound, maxval=bound
    )
    x = jax.random.normal(kx, (batch_size, input_size), jnp.float32)

    # f32 path.
    out = jax.block_until_ready(linear_forward(x, weight, bias))

    # Mirror the PyTorch module's size print, outside the (jitted) forward path.
    print("\tIn Model: input size", tuple(x.shape), "output size", tuple(out.shape))

    ref = x @ weight.T + bias
    assert out.shape == (batch_size, output_size)
    assert jnp.allclose(out, ref, atol=1e-5, rtol=1e-5)

    # bf16-MXU path (native on v6e/v7x, halves HBM traffic) -- looser tolerance.
    out_bf16 = jax.block_until_ready(
        linear_forward(x, weight, bias, compute_dtype=jnp.bfloat16)
    )
    assert out_bf16.shape == (batch_size, output_size)
    assert jnp.allclose(out_bf16, ref, atol=2e-2, rtol=2e-2)

    print("KERNEL_OK")
</pallas_src>

<mosaic_0001>
module attributes {stable_mosaic.version = 11 : i64} {
  func.func @linear_kernel(%arg0: i32, %arg1: i32, %arg2: i32, %arg3: memref<32x128xf32, #tpu.memory_space<vmem>>, %arg4: memref<128x128xf32, #tpu.memory_space<vmem>>, %arg5: memref<1x128xf32, #tpu.memory_space<vmem>>, %arg6: memref<32x128xf32, #tpu.memory_space<vmem>>) attributes {dimension_semantics = [#tpu.dimension_semantics<parallel>, #tpu.dimension_semantics<parallel>, #tpu.dimension_semantics<arbitrary>], iteration_bounds = array<i64: 1, 1, 1>, scalar_prefetch = 0 : i64, scratch_operands = 0 : i64, tpu.core_type = #tpu.core_type<tc>, window_params = [{transform_indices = @transform_0, window_bounds = array<i64: 32, 128>}, {transform_indices = @transform_1, window_bounds = array<i64: 128, 128>}, {transform_indices = @transform_2, window_bounds = array<i64: 1, 128>}, {transform_indices = @transform_3, window_bounds = array<i64: 32, 128>}]} {
    %c0_i32 = arith.constant 0 : i32
    %0 = arith.cmpi eq, %arg2, %c0_i32 : i32
    %1 = arith.extui %0 : i1 to i32
    %c0_i32_0 = arith.constant 0 : i32
    %2 = arith.cmpi ne, %1, %c0_i32_0 : i32
    scf.if %2 {
      %cst_8 = arith.constant 0.000000e+00 : f32
      %9 = vector.broadcast %cst_8 : f32 to vector<32x128xf32>
      %c0_9 = arith.constant 0 : index
      %c0_10 = arith.constant 0 : index
      %10 = vector.load %arg5[%c0_9, %c0_10] : memref<1x128xf32, #tpu.memory_space<vmem>>, vector<1x128xf32>
      %11 = vector.broadcast %10 : vector<1x128xf32> to vector<32x128xf32>
      %12 = arith.addf %9, %11 : vector<32x128xf32>
      %c0_11 = arith.constant 0 : index
      %c0_12 = arith.constant 0 : index
      %13 = vector.load %arg6[%c0_11, %c0_12] : memref<32x128xf32, #tpu.memory_space<vmem>>, vector<32x128xf32>
      tpu.vector_store %arg6[%c0_11, %c0_12], %12 {strides = array<i32>} : memref<32x128xf32, #tpu.memory_space<vmem>>, vector<32x128xf32>,
    } else {
    }
    %c0 = arith.constant 0 : index
    %c0_1 = arith.constant 0 : index
    %3 = vector.load %arg6[%c0, %c0_1] : memref<32x128xf32, #tpu.memory_space<vmem>>, vector<32x128xf32>
    %c0_2 = arith.constant 0 : index
    %c0_3 = arith.constant 0 : index
    %4 = vector.load %arg3[%c0_2, %c0_3] : memref<32x128xf32, #tpu.memory_space<vmem>>, vector<32x128xf32>
    %c0_4 = arith.constant 0 : index
    %c0_5 = arith.constant 0 : index
    %5 = vector.load %arg4[%c0_4, %c0_5] : memref<128x128xf32, #tpu.memory_space<vmem>>, vector<128x128xf32>
    %cst = arith.constant dense<0.000000e+00> : vector<32x128xf32>
    %6 = tpu.matmul %4, %5, %cst {dimension_numbers = #tpu.dot_dimension_numbers<[1], [0], [0], [1], [0, 0, 1, 1], [], []>} : vector<32x128xf32>, vector<128x128xf32>, vector<32x128xf32> -> vector<32x128xf32>
    %7 = arith.addf %3, %6 : vector<32x128xf32>
    %c0_6 = arith.constant 0 : index
    %c0_7 = arith.constant 0 : index
    %8 = vector.load %arg6[%c0_6, %c0_7] : memref<32x128xf32, #tpu.memory_space<vmem>>, vector<32x128xf32>
    tpu.vector_store %arg6[%c0_6, %c0_7], %7 {strides = array<i32>} : memref<32x128xf32, #tpu.memory_space<vmem>>, vector<32x128xf32>,
    return
  }
  func.func @transform_0(%arg0: i32, %arg1: i32, %arg2: i32) -> (i32, i32) {
    %c0_i32 = arith.constant 0 : i32
    return %arg0, %arg2 : i32, i32
  }
  func.func @transform_1(%arg0: i32, %arg1: i32, %arg2: i32) -> (i32, i32) {
    %c0_i32 = arith.constant 0 : i32
    return %arg2, %arg1 : i32, i32
  }
  func.func @transform_2(%arg0: i32, %arg1: i32, %arg2: i32) -> (i32, i32) {
    %c0_i32 = arith.constant 0 : i32
    %c0_i32_0 = arith.constant 0 : i32
    return %c0_i32, %arg1 : i32, i32
  }
  func.func @transform_3(%arg0: i32, %arg1: i32, %arg2: i32) -> (i32, i32) {
    %c0_i32 = arith.constant 0 : i32
    return %arg0, %arg1 : i32, i32
  }
}

</mosaic_0001>

<llo_original>
// kernel: linear_forward.1
$region0: #{linear_forward.1}
  #allocation0 [shape = 'u32[]', space=smem, size = 0x4, offset = 0x4, fixed_abs, tag = 'smem constant byte address 0x4 - core index']
  #allocation1 [shape = 'u32[144,128]{1,0:T(1,128)}', space=vmem, size = 0x12000, scoped, tag = 'internal scratch']
  %s0 = inlined_call_operand.vmem [shape: f32[32,128], index: 0, kind: input, shape index: {}]
  %s1 = inlined_call_operand.vmem [shape: f32[128,128], index: 1, kind: input, shape index: {}]
  %s2 = inlined_call_operand.vmem [shape: f32[1,128], index: 2, kind: input, shape index: {}]
  %s3 = inlined_call_operand.vmem [shape: f32[32,128], index: 3, kind: output, shape index: {}]
  %s4 = sld [smem:[#allocation0]]
  $region26: #{linear_forward.1} parent=0
    _
  %s6 = ssub.s32 1, %s4
  %s7 = scalar_select 0, %s6, %s4
  // Predicated region
  $region2: #{linear_forward.1} parent=0 // pred_check
    _
  $region3: #{linear_forward.1} parent=0 // pred_check_branch
    %9 = sbr.rel (0) target = $region5
  $region4: #{linear_forward.1} parent=0 // pred_region
    _
  $region5: #{linear_forward.1} parent=0 // pred_fallthru
    _
  // Predicated region
  $region6: #{linear_forward.1} parent=0 // pred_check
    _
  $region7: #{linear_forward.1} parent=0 // pred_check_branch
    %11 = sbr.rel (0) target = $region9
  $region8: #{linear_forward.1} parent=0 // pred_region
    _
  $region9: #{linear_forward.1} parent=0 // pred_fallthru
    _
  // Predicated region
  $region10: #{linear_forward.1} parent=0 // pred_check
    _
  $region11: #{linear_forward.1} parent=0 // pred_check_branch
    %13 = sbr.rel (0) target = $region13
  $region12: #{linear_forward.1} parent=0 // pred_region
    _
  $region13: #{linear_forward.1} parent=0 // pred_fallthru
    _
  %p14 = scmp.eq.s32.totalorder 0, 0
  // Predicated region
  $region14: #{linear_forward.1} parent=0 // pred_check
    %p15 = pneg %p14
  $region15: #{linear_forward.1} parent=0 // pred_check_branch
    %17 = sbr.rel (%p15) target = $region17
  $region16: #{linear_forward.1} parent=0 // pred_region
    %v18 = vld [vmem:[%s2] sm:$0x1]
    %v20 = vlaneseq
    %v21 = vshrl.u32 %v20, 7
    %v22 = vsub.s32 0, %v21
    %v23 = vrot.slane %v18, %v22
    %v25 = vadd.f32 %v23, 0.0
    %26 = vst [vmem:[%s3] sm:$0xff] %v25
    %27 = vst [vmem:[%s3 + $0x8] sm:$0xff] %v25
    %28 = vst [vmem:[%s3 + $0x10] sm:$0xff] %v25
    %29 = vst [vmem:[%s3 + $0x18] sm:$0xff] %v25
  $region17: #{linear_forward.1} parent=0 // pred_fallthru
    _
  %v30 = vld [vmem:[%s3] sm:$0xff]
  %v31 = vld [vmem:[%s3 + $0x8] sm:$0xff]
  %v32 = vld [vmem:[%s3 + $0x10] sm:$0xff]
  %v33 = vld [vmem:[%s3 + $0x18] sm:$0xff]
  %v34 = vld [vmem:[%s0] sm:$0xff]
  %v35 = vld [vmem:[%s0 + $0x8] sm:$0xff]
  %v36 = vld [vmem:[%s0 + $0x10] sm:$0xff]
  %v37 = vld [vmem:[%s0 + $0x18] sm:$0xff]
  %v38 = vld [vmem:[%s1] sm:$0xff]
  %v39 = vld [vmem:[%s1 + $0x8] sm:$0xff]
  %v40 = vld [vmem:[%s1 + $0x10] sm:$0xff]
  %v41 = vld [vmem:[%s1 + $0x18] sm:$0xff]
  %v42 = vld [vmem:[%s1 + $0x20] sm:$0xff]
  %v43 = vld [vmem:[%s1 + $0x28] sm:$0xff]
  %v44 = vld [vmem:[%s1 + $0x30] sm:$0xff]
  %v45 = vld [vmem:[%s1 + $0x38] sm:$0xff]
  %v46 = vld [vmem:[%s1 + $0x40] sm:$0xff]
  %v47 = vld [vmem:[%s1 + $0x48] sm:$0xff]
  %v48 = vld [vmem:[%s1 + $0x50] sm:$0xff]
  %v49 = vld [vmem:[%s1 + $0x58] sm:$0xff]
  %v50 = vld [vmem:[%s1 + $0x60] sm:$0xff]
  %v51 = vld [vmem:[%s1 + $0x68] sm:$0xff]
  %v52 = vld [vmem:[%s1 + $0x70] sm:$0xff]
  %v53 = vld [vmem:[%s1 + $0x78] sm:$0xff]
  %54 = vmatprep.subr.mxu0 0.0
  %55 = vmatpush1.msra.mxu0 %v38
  %56 = vmatprep.subr.mxu0 0.0
  %57 = vmatpush1.msra.mxu0 %v39
  %58 = vmatprep.subr.mxu0 0.0
  %59 = vmatpush1.msra.mxu0 %v40
  %60 = vmatprep.subr.mxu0 0.0
  %61 = vmatpush1.msra.mxu0 %v41
  %62 = vmatprep.subr.mxu0 0.0
  %63 = vmatpush1.msra.mxu0 %v42
  %64 = vmatprep.subr.mxu0 0.0
  %65 = vmatpush1.msra.mxu0 %v43
  %66 = vmatprep.subr.mxu0 0.0
  %67 = vmatpush1.msra.mxu0 %v44
  %68 = vmatprep.subr.mxu0 0.0
  %69 = vmatpush1.msra.mxu0 %v45
  %70 = vmatprep.subr.mxu0 0.0
  %71 = vmatpush1.msra.mxu0 %v46
  %72 = vmatprep.subr.mxu0 0.0
  %73 = vmatpush1.msra.mxu0 %v47
  %74 = vmatprep.subr.mxu0 0.0
  %75 = vmatpush1.msra.mxu0 %v48
  %76 = vmatprep.subr.mxu0 0.0
  %77 = vmatpush1.msra.mxu0 %v49
  %78 = vmatprep.subr.mxu0 0.0
  %79 = vmatpush1.msra.mxu0 %v50
  %80 = vmatprep.subr.mxu0 0.0
  %81 = vmatpush1.msra.mxu0 %v51
  %82 = vmatprep.subr.mxu0 0.0
  %83 = vmatpush1.msra.mxu0 %v52
  %84 = vmatprep.subr.mxu0 0.0
  %85 = vmatpush1.msra.mxu0 %v53
  %86 = vmatprep.subr.mxu0 0.0
  %87 = vmatpush1.msra.mxu0 0.0
  %88 = vmatprep.subr.mxu0 0.0
  %89 = vmatpush1.msra.mxu0 0.0
  %90 = vmatprep.subr.mxu0 0.0
  %91 = vmatpush1.msra.mxu0 0.0
  %92 = vmatprep.subr.mxu0 0.0
  %93 = vmatpush1.msra.mxu0 0.0
  %94 = vmatprep.subr.mxu0 0.0
  %95 = vmatpush1.msra.mxu0 0.0
  %96 = vmatprep.subr.mxu0 0.0
  %97 = vmatpush1.msra.mxu0 0.0
  %98 = vmatprep.subr.mxu0 0.0
  %99 = vmatpush1.msra.mxu0 0.0
  %100 = vmatprep.subr.mxu0 0.0
  %101 = vmatpush1.msra.mxu0 0.0
  %102 = vmatprep.subr.mxu0 0.0
  %103 = vmatpush1.msra.mxu0 0.0
  %104 = vmatprep.subr.mxu0 0.0
  %105 = vmatpush1.msra.mxu0 0.0
  %106 = vmatprep.subr.mxu0 0.0
  %107 = vmatpush1.msra.mxu0 0.0
  %108 = vmatprep.subr.mxu0 0.0
  %109 = vmatpush1.msra.mxu0 0.0
  %110 = vmatprep.subr.mxu0 0.0
  %111 = vmatpush1.msra.mxu0 0.0
  %112 = vmatprep.subr.mxu0 0.0
  %113 = vmatpush1.msra.mxu0 0.0
  %114 = vmatprep.subr.mxu0 0.0
  %115 = vmatpush1.msra.mxu0 0.0
  %116 = vmatprep.subr.mxu0 0.0
  %117 = vmatpush1.msra.mxu0 0.0
  %118 = vmatprep.mubr.f32.mxu0 0.0
  %119 = vmatmul.mubr.f32.gmra.mrb[0].mxu0 %v34
  %v120 = vpop.f32.mrb[0].mxu0
  %v121 = vadd.f32 0.0, %v120
  %v122 = vpop.f32.mrb[0].mxu0
  %123 = vmatprep.mubr.f32.mxu0 0.0
  %124 = vmatmul.mubr.f32.gmra.mrb[0].mxu0 %v35
  %v125 = vpop.f32.mrb[0].mxu0
  %v126 = vadd.f32 0.0, %v125
  %v127 = vpop.f32.mrb[0].mxu0
  %128 = vmatprep.mubr.f32.mxu0 0.0
  %129 = vmatmul.mubr.f32.gmra.mrb[0].mxu0 %v36
  %v130 = vpop.f32.mrb[0].mxu0
  %v131 = vadd.f32 0.0, %v130
  %v132 = vpop.f32.mrb[0].mxu0
  %133 = vmatprep.mubr.f32.mxu0 0.0
  %134 = vmatmul.mubr.f32.gmra.mrb[0].mxu0 %v37
  %v135 = vpop.f32.mrb[0].mxu0
  %v136 = vadd.f32 0.0, %v135
  %v137 = vpop.f32.mrb[0].mxu0
  %138 = vdwg.mxu0
  %v139 = vadd.f32 %v30, %v121
  %v140 = vadd.f32 %v31, %v126
  %v141 = vadd.f32 %v32, %v131
  %v142 = vadd.f32 %v33, %v136
  %143 = vst [vmem:[%s3] sm:$0xff] %v139
  %144 = vst [vmem:[%s3 + $0x8] sm:$0xff] %v140
  %145 = vst [vmem:[%s3 + $0x10] sm:$0xff] %v141
  %146 = vst [vmem:[%s3 + $0x18] sm:$0xff] %v142
  // Predicated region
  $region18: #{linear_forward.1} parent=0 // pred_check
    _
  $region19: #{linear_forward.1} parent=0 // pred_check_branch
    %148 = sbr.rel (0) target = $region21
  $region20: #{linear_forward.1} parent=0 // pred_region
    _
  $region21: #{linear_forward.1} parent=0 // pred_fallthru
    _
  // Predicated region
  $region22: #{linear_forward.1} parent=0 // pred_check
    _
  $region23: #{linear_forward.1} parent=0 // pred_check_branch
    %150 = sbr.rel (0) target = $region25
  $region24: #{linear_forward.1} parent=0 // pred_region
    _
  $region25: #{linear_forward.1} parent=0 // pred_fallthru
    _

</llo_original>
